<compile_context>
chip_gen: v6e
topology: v6e:2x2x1
jax: 0.10.0
libtpu: 0.0.40
codegen_flags: <defaults>
</compile_context>

<pallas_src>
import functools

import jax
import jax.numpy as jnp
from jax import lax
from jax.experimental import pallas as pl
from jax.experimental.pallas import tpu as pltpu

LANES = 128          # vreg lane width
SUBLANES = 8         # f32 sublane count
MAX_ROW_TILE = 2048  # 2048 x 128: 1 MiB per f32 input block (8 MiB in flight)
MAX_ROW_UNIT = 32    # worst-case sublane packing (8-bit dtypes)


def _round_up(x, m):
    return ((x + m - 1) // m) * m


def _num_tensorcores():
    """Best-effort TensorCore count (2 on v7x, 1 on v5e/v6e). Falls back to 1."""
    probes = []
    try:
        probes.append(pltpu.get_tpu_info())
    except Exception:
        pass
    try:
        probes.append(jax.devices()[0])
    except Exception:
        pass
    for obj in probes:
        for name in ("num_cores", "core_count", "num_tensorcores", "tensorcore_count"):
            n = getattr(obj, name, None)
            if isinstance(n, int) and 1 <= n <= 8:
                return n
    try:
        kind = jax.devices()[0].device_kind.lower()
        if "v7" in kind or "7x" in kind:
            return 2
    except Exception:
        pass
    return 1


_NUM_TC = _num_tensorcores()


def _row_unit(dtype):
    """Minimum row granularity for clean (sublane, lane) tiling of this dtype."""
    bits = jnp.dtype(dtype).itemsize * 8
    return max(SUBLANES, SUBLANES * 32 // bits)   # f32->8, bf16->16, int8->32


def _cl_dice_sums_kernel(mask_true_ref, mask_pred_ref, skel_true_ref, skel_pred_ref,
                         out_ref, *, row_tile, valid_rows, tiles_per_part, needs_mask):
    """Accumulate 4 partial sums into a resident (1, 4, 8, 128) output block.

    out[p, 0] -> partial sum(skel_pred * mask_true)
    out[p, 1] -> partial sum(skel_pred)
    out[p, 2] -> partial sum(skel_true * mask_pred)
    out[p, 3] -> partial sum(skel_true)
    """
    p = pl.program_id(0)
    t = pl.program_id(1)

    @pl.when(t == 0)
    def _():
        out_ref[...] = jnp.zeros_like(out_ref)

    # Narrow dtypes (int8/bf16) are widened in-register here; HBM traffic stays
    # at the native width.
    mt = mask_true_ref[...].astype(jnp.float32)
    mp = mask_pred_ref[...].astype(jnp.float32)
    st = skel_true_ref[...].astype(jnp.float32)
    sp = skel_pred_ref[...].astype(jnp.float32)

    p0 = sp * mt
    p1 = sp
    p2 = st * mp
    p3 = st

    def fold(x):
        # VPU-only partial reduction: (row_tile,128) -> (row_tile/8, 8, 128),
        # summed over the leading (vreg-slab) axis.  No XLU in the hot loop.
        return jnp.sum(x.reshape(row_tile // SUBLANES, SUBLANES, LANES), axis=0)

    def accumulate(a0, a1, a2, a3):
        out_ref[0, 0] += fold(a0)
        out_ref[0, 1] += fold(a1)
        out_ref[0, 2] += fold(a2)
        out_ref[0, 3] += fold(a3)

    if needs_mask:
        # Only the partial last tile (or a clamped out-of-range (p, t)) pays for
        # the iota/compare/select; interior tiles take the plain branch.
        base = (p * tiles_per_part + t) * row_tile
        is_full = base + row_tile <= valid_rows

        @pl.when(is_full)
        def _():
            accumulate(p0, p1, p2, p3)

        @pl.when(jnp.logical_not(is_full))
        def _():
            row_ids = base + lax.broadcasted_iota(jnp.int32, (row_tile, LANES), 0)
            valid = row_ids < valid_rows
            zero = jnp.float32(0.0)
            accumulate(jnp.where(valid, p0, zero),
                       jnp.where(valid, p1, zero),
                       jnp.where(valid, p2, zero),
                       jnp.where(valid, p3, zero))
    else:
        accumulate(p0, p1, p2, p3)


def _to_rows(x):
    """Flatten to a lane-dense (rows, 128) slab at the *narrowest natural dtype*.

    bool masks become int8 (4x fewer HBM bytes than f32); bf16/f32/int inputs
    keep their dtype — widening to f32 happens in-register inside the kernel.
    Copies only when padding is required (element count not 128-aligned or tiny).
    """
    x = jnp.asarray(x)
    if x.dtype == jnp.bool_:
        x = x.astype(jnp.int8)
    elif not (jnp.issubdtype(x.dtype, jnp.floating) or
              jnp.issubdtype(x.dtype, jnp.integer)):
        x = x.astype(jnp.float32)
    flat = x.reshape(-1)
    n = flat.shape[0]
    target = max(_round_up(n, LANES), MAX_ROW_UNIT * LANES)
    if target != n:
        # Zero padding is sum-neutral.
        flat = jnp.concatenate([flat, jnp.zeros((target - n,), flat.dtype)])
    return flat.reshape(-1, LANES)


@functools.partial(jax.jit, static_argnames=("iter_", "smooth", "exclude_background"))
def cl_dice_loss(mask_true, mask_pred, skel_true, skel_pred,
                 iter_=3, smooth=1.0, exclude_background=False):
    # iter_ / exclude_background are unused in the reference forward pass
    # (the PyTorch module's forward() ignores them as well).
    mt = _to_rows(mask_true)
    mp = _to_rows(mask_pred)
    st = _to_rows(skel_true)
    sp = _to_rows(skel_pred)

    rows = mt.shape[0]
    row_unit = max(_row_unit(a.dtype) for a in (mt, mp, st, sp))
    row_tile = min(MAX_ROW_TILE, (rows // row_unit) * row_unit)
    num_tiles = pl.cdiv(rows, row_tile)

    # Use a 2-way parallel leading axis only when the chip actually has 2
    # TensorCores (v7x) and there is more than one tile of work.
    num_parallel = min(_NUM_TC, 2)
    if num_tiles < 2:
        num_parallel = 1
    tiles_per_part = pl.cdiv(num_tiles, num_parallel)
    needs_mask = (rows % row_tile != 0) or (num_tiles % num_parallel != 0)

    def in_map(p, t):
        # Clamp so a fully out-of-range (p, t) re-reads the last in-bounds
        # block; the in-kernel row mask zeroes its contribution.
        return (jnp.minimum(p * tiles_per_part + t, num_tiles - 1), 0)

    in_spec = pl.BlockSpec((row_tile, LANES), in_map)
    out_spec = pl.BlockSpec((1, 4, SUBLANES, LANES), lambda p, t: (p, 0, 0, 0))

    kernel = functools.partial(
        _cl_dice_sums_kernel,
        row_tile=row_tile,
        valid_rows=rows,
        tiles_per_part=tiles_per_part,
        needs_mask=needs_mask,
    )

    in_bytes = sum(int(a.size) * a.dtype.itemsize for a in (mt, mp, st, sp))
    out_bytes = num_parallel * 4 * SUBLANES * LANES * 4
    cost = pl.CostEstimate(flops=6 * rows * LANES,
                           transcendentals=0,
                           bytes_accessed=in_bytes + out_bytes)

    partials = pl.pallas_call(
        kernel,
        out_shape=jax.ShapeDtypeStruct((num_parallel, 4, SUBLANES, LANES), jnp.float32),
        grid_spec=pltpu.PrefetchScalarGridSpec(
            num_scalar_prefetch=0,
            grid=(num_parallel, tiles_per_part),
            in_specs=[in_spec, in_spec, in_spec, in_spec],
            out_specs=out_spec,
        ),
        compiler_params=pltpu.CompilerParams(
            dimension_semantics=("parallel", "arbitrary"),
            # 8 MiB of double-buffered inputs + compiler scratch: raise the
            # v5e 16 MiB scoped default; 32 MiB is safe on every generation.
            vmem_limit_bytes=32 << 20),
        cost_estimate=cost,
    )(mt, mp, st, sp)

    # One-time cross-lane/sublane reduction + scalar formula, outside the kernel.
    sums = jnp.sum(partials, axis=(0, 2, 3))  # shape (4,)
    s0, s1, s2, s3 = sums[0], sums[1], sums[2], sums[3]
    smooth = jnp.float32(smooth)
    tprec = (s0 + smooth) / (s1 + smooth)
    tsens = (s2 + smooth) / (s3 + smooth)
    return 1.0 - 2.0 * (tprec * tsens) / (tprec + tsens)


def cl_dice_loss_ref(mask_true, mask_pred, skel_true, skel_pred, smooth=1.0):
    f = lambda a: jnp.asarray(a).astype(jnp.float32)
    mask_true, mask_pred = f(mask_true), f(mask_pred)
    skel_true, skel_pred = f(skel_true), f(skel_pred)
    s0 = jnp.sum(skel_pred * mask_true)
    s1 = jnp.sum(skel_pred)
    s2 = jnp.sum(skel_true * mask_pred)
    s3 = jnp.sum(skel_true)
    tprec = (s0 + smooth) / (s1 + smooth)
    tsens = (s2 + smooth) / (s3 + smooth)
    return 1.0 - 2.0 * (tprec * tsens) / (tprec + tsens)


if __name__ == "__main__":
    key = jax.random.PRNGKey(0)

    # --- Test 1: small NCHW shapes matching the PyTorch module, f32 inputs ---
    k1, k2, k3, k4, k5, k6, k7, k8 = jax.random.split(key, 8)
    B, C, H, W = 2, 4, 16, 16

    mask_true = (jax.random.uniform(k1, (B, C, H, W)) > 0.5).astype(jnp.float32)
    mask_pred = jax.random.uniform(k2, (B, C, H, W), dtype=jnp.float32)
    skel_true = (jax.random.uniform(k3, (B, C, H, W)) > 0.7).astype(jnp.float32)
    skel_pred = jax.random.uniform(k4, (B, C, H, W), dtype=jnp.float32)

    loss = cl_dice_loss(mask_true, mask_pred, skel_true, skel_pred,
                        iter_=3, smooth=1.0)
    loss = jax.block_until_ready(loss)
    ref = cl_dice_loss_ref(mask_true, mask_pred, skel_true, skel_pred, smooth=1.0)
    assert jnp.allclose(loss, ref, rtol=1e-5, atol=1e-5), (loss, ref)

    # --- Test 2: odd (non-128-aligned) size, mixed narrow dtypes; exercises the
    #     partial-last-tile edge-mask path and the bool->int8 / bf16 fast paths ---
    B2, C2, H2, W2 = 1, 3, 129, 257
    mask_true2 = jax.random.uniform(k5, (B2, C2, H2, W2)) > 0.5              # bool
    mask_pred2 = jax.random.uniform(k6, (B2, C2, H2, W2), dtype=jnp.float32)  # f32
    skel_true2 = jax.random.uniform(k7, (B2, C2, H2, W2)) > 0.7              # bool
    skel_pred2 = jax.random.uniform(k8, (B2, C2, H2, W2),
                                    dtype=jnp.float32).astype(jnp.bfloat16)  # bf16

    loss2 = cl_dice_loss(mask_true2, mask_pred2, skel_true2, skel_pred2,
                         iter_=3, smooth=1.0)
    loss2 = jax.block_until_ready(loss2)
    ref2 = cl_dice_loss_ref(mask_true2, mask_pred2, skel_true2, skel_pred2, smooth=1.0)
    assert jnp.allclose(loss2, ref2, rtol=1e-4, atol=1e-4), (loss2, ref2)

    print("KERNEL_OK")
</pallas_src>

<mosaic_0001>
module attributes {stable_mosaic.version = 11 : i64} {
  func.func @_cl_dice_sums_kernel(%arg0: i32, %arg1: i32, %arg2: memref<32x128xf32, #tpu.memory_space<vmem>>, %arg3: memref<32x128xf32, #tpu.memory_space<vmem>>, %arg4: memref<32x128xf32, #tpu.memory_space<vmem>>, %arg5: memref<32x128xf32, #tpu.memory_space<vmem>>, %arg6: memref<1x4x8x128xf32, #tpu.memory_space<vmem>>) attributes {dimension_semantics = [#tpu.dimension_semantics<parallel>, #tpu.dimension_semantics<arbitrary>], iteration_bounds = array<i64: 1, 1>, scalar_prefetch = 0 : i64, scratch_operands = 0 : i64, tpu.core_type = #tpu.core_type<tc>, window_params = [{transform_indices = @transform_0, window_bounds = array<i64: 32, 128>}, {transform_indices = @transform_1, window_bounds = array<i64: 32, 128>}, {transform_indices = @transform_2, window_bounds = array<i64: 32, 128>}, {transform_indices = @transform_3, window_bounds = array<i64: 32, 128>}, {transform_indices = @transform_4, window_bounds = array<i64: 1, 4, 8, 128>}]} {
    %c0_i32 = arith.constant 0 : i32
    %0 = arith.cmpi eq, %arg1, %c0_i32 : i32
    %1 = arith.extui %0 : i1 to i32
    %c0_i32_0 = arith.constant 0 : i32
    %2 = arith.cmpi ne, %1, %c0_i32_0 : i32
    scf.if %2 {
      %cst_40 = arith.constant 0.000000e+00 : f32
      %41 = vector.broadcast %cst_40 : f32 to vector<1x4x8x128xf32>
      %c0_41 = arith.constant 0 : index
      %c0_42 = arith.constant 0 : index
      %c0_43 = arith.constant 0 : index
      %c0_44 = arith.constant 0 : index
      %42 = vector.load %arg6[%c0_41, %c0_42, %c0_43, %c0_44] : memref<1x4x8x128xf32, #tpu.memory_space<vmem>>, vector<1x4x8x128xf32>
      tpu.vector_store %arg6[%c0_41, %c0_42, %c0_43, %c0_44], %41 {strides = array<i32>} : memref<1x4x8x128xf32, #tpu.memory_space<vmem>>, vector<1x4x8x128xf32>,
    } else {
    }
    %c0 = arith.constant 0 : index
    %c0_1 = arith.constant 0 : index
    %3 = vector.load %arg2[%c0, %c0_1] : memref<32x128xf32, #tpu.memory_space<vmem>>, vector<32x128xf32>
    %c0_2 = arith.constant 0 : index
    %c0_3 = arith.constant 0 : index
    %4 = vector.load %arg3[%c0_2, %c0_3] : memref<32x128xf32, #tpu.memory_space<vmem>>, vector<32x128xf32>
    %c0_4 = arith.constant 0 : index
    %c0_5 = arith.constant 0 : index
    %5 = vector.load %arg4[%c0_4, %c0_5] : memref<32x128xf32, #tpu.memory_space<vmem>>, vector<32x128xf32>
    %c0_6 = arith.constant 0 : index
    %c0_7 = arith.constant 0 : index
    %6 = vector.load %arg5[%c0_6, %c0_7] : memref<32x128xf32, #tpu.memory_space<vmem>>, vector<32x128xf32>
    %7 = arith.mulf %6, %3 : vector<32x128xf32>
    %8 = arith.mulf %5, %4 : vector<32x128xf32>
    %c0_8 = arith.constant 0 : index
    %c0_9 = arith.constant 0 : index
    %c0_10 = arith.constant 0 : index
    %c0_11 = arith.constant 0 : index
    %9 = vector.load %arg6[%c0_8, %c0_9, %c0_10, %c0_11] : memref<1x4x8x128xf32, #tpu.memory_space<vmem>>, vector<1x1x8x128xf32>
    %10 = vector.shape_cast %9 : vector<1x1x8x128xf32> to vector<8x128xf32>
    %11 = vector.shape_cast %7 : vector<32x128xf32> to vector<4x8x128xf32>
    %cst = arith.constant dense<0.000000e+00> : vector<8x128xf32>
    %12 = vector.multi_reduction <add>, %11, %cst [0] : vector<4x8x128xf32> to vector<8x128xf32>
    %13 = arith.addf %10, %12 : vector<8x128xf32>
    %c0_12 = arith.constant 0 : index
    %c0_13 = arith.constant 0 : index
    %c0_14 = arith.constant 0 : index
    %c0_15 = arith.constant 0 : index
    %14 = vector.load %arg6[%c0_12, %c0_13, %c0_14, %c0_15] : memref<1x4x8x128xf32, #tpu.memory_space<vmem>>, vector<1x1x8x128xf32>
    %15 = vector.shape_cast %14 : vector<1x1x8x128xf32> to vector<8x128xf32>
    %16 = vector.shape_cast %13 : vector<8x128xf32> to vector<1x1x8x128xf32>
    tpu.vector_store %arg6[%c0_12, %c0_13, %c0_14, %c0_15], %16 {strides = array<i32>} : memref<1x4x8x128xf32, #tpu.memory_space<vmem>>, vector<1x1x8x128xf32>,
    %c0_16 = arith.constant 0 : index
    %c1 = arith.constant 1 : index
    %c0_17 = arith.constant 0 : index
    %c0_18 = arith.constant 0 : index
    %17 = vector.load %arg6[%c0_16, %c1, %c0_17, %c0_18] : memref<1x4x8x128xf32, #tpu.memory_space<vmem>>, vector<1x1x8x128xf32>
    %18 = vector.shape_cast %17 : vector<1x1x8x128xf32> to vector<8x128xf32>
    %19 = vector.shape_cast %6 : vector<32x128xf32> to vector<4x8x128xf32>
    %cst_19 = arith.constant dense<0.000000e+00> : vector<8x128xf32>
    %20 = vector.multi_reduction <add>, %19, %cst_19 [0] : vector<4x8x128xf32> to vector<8x128xf32>
    %21 = arith.addf %18, %20 : vector<8x128xf32>
    %c0_20 = arith.constant 0 : index
    %c1_21 = arith.constant 1 : index
    %c0_22 = arith.constant 0 : index
    %c0_23 = arith.constant 0 : index
    %22 = vector.load %arg6[%c0_20, %c1_21, %c0_22, %c0_23] : memref<1x4x8x128xf32, #tpu.memory_space<vmem>>, vector<1x1x8x128xf32>
    %23 = vector.shape_cast %22 : vector<1x1x8x128xf32> to vector<8x128xf32>
    %24 = vector.shape_cast %21 : vector<8x128xf32> to vector<1x1x8x128xf32>
    tpu.vector_store %arg6[%c0_20, %c1_21, %c0_22, %c0_23], %24 {strides = array<i32>} : memref<1x4x8x128xf32, #tpu.memory_space<vmem>>, vector<1x1x8x128xf32>,
    %c0_24 = arith.constant 0 : index
    %c2 = arith.constant 2 : index
    %c0_25 = arith.constant 0 : index
    %c0_26 = arith.constant 0 : index
    %25 = vector.load %arg6[%c0_24, %c2, %c0_25, %c0_26] : memref<1x4x8x128xf32, #tpu.memory_space<vmem>>, vector<1x1x8x128xf32>
    %26 = vector.shape_cast %25 : vector<1x1x8x128xf32> to vector<8x128xf32>
    %27 = vector.shape_cast %8 : vector<32x128xf32> to vector<4x8x128xf32>
    %cst_27 = arith.constant dense<0.000000e+00> : vector<8x128xf32>
    %28 = vector.multi_reduction <add>, %27, %cst_27 [0] : vector<4x8x128xf32> to vector<8x128xf32>
    %29 = arith.addf %26, %28 : vector<8x128xf32>
    %c0_28 = arith.constant 0 : index
    %c2_29 = arith.constant 2 : index
    %c0_30 = arith.constant 0 : index
    %c0_31 = arith.constant 0 : index
    %30 = vector.load %arg6[%c0_28, %c2_29, %c0_30, %c0_31] : memref<1x4x8x128xf32, #tpu.memory_space<vmem>>, vector<1x1x8x128xf32>
    %31 = vector.shape_cast %30 : vector<1x1x8x128xf32> to vector<8x128xf32>
    %32 = vector.shape_cast %29 : vector<8x128xf32> to vector<1x1x8x128xf32>
    tpu.vector_store %arg6[%c0_28, %c2_29, %c0_30, %c0_31], %32 {strides = array<i32>} : memref<1x4x8x128xf32, #tpu.memory_space<vmem>>, vector<1x1x8x128xf32>,
    %c0_32 = arith.constant 0 : index
    %c3 = arith.constant 3 : index
    %c0_33 = arith.constant 0 : index
    %c0_34 = arith.constant 0 : index
    %33 = vector.load %arg6[%c0_32, %c3, %c0_33, %c0_34] : memref<1x4x8x128xf32, #tpu.memory_space<vmem>>, vector<1x1x8x128xf32>
    %34 = vector.shape_cast %33 : vector<1x1x8x128xf32> to vector<8x128xf32>
    %35 = vector.shape_cast %5 : vector<32x128xf32> to vector<4x8x128xf32>
    %cst_35 = arith.constant dense<0.000000e+00> : vector<8x128xf32>
    %36 = vector.multi_reduction <add>, %35, %cst_35 [0] : vector<4x8x128xf32> to vector<8x128xf32>
    %37 = arith.addf %34, %36 : vector<8x128xf32>
    %c0_36 = arith.constant 0 : index
    %c3_37 = arith.constant 3 : index
    %c0_38 = arith.constant 0 : index
    %c0_39 = arith.constant 0 : index
    %38 = vector.load %arg6[%c0_36, %c3_37, %c0_38, %c0_39] : memref<1x4x8x128xf32, #tpu.memory_space<vmem>>, vector<1x1x8x128xf32>
    %39 = vector.shape_cast %38 : vector<1x1x8x128xf32> to vector<8x128xf32>
    %40 = vector.shape_cast %37 : vector<8x128xf32> to vector<1x1x8x128xf32>
    tpu.vector_store %arg6[%c0_36, %c3_37, %c0_38, %c0_39], %40 {strides = array<i32>} : memref<1x4x8x128xf32, #tpu.memory_space<vmem>>, vector<1x1x8x128xf32>,
    return
  }
  func.func @transform_0(%arg0: i32, %arg1: i32) -> (i32, i32) {
    %c1_i32 = arith.constant 1 : i32
    %0 = arith.muli %arg0, %c1_i32 : i32
    %1 = arith.addi %0, %arg1 : i32
    %c0_i32 = arith.constant 0 : i32
    %2 = arith.minsi %1, %c0_i32 : i32
    %c0_i32_0 = arith.constant 0 : i32
    %c0_i32_1 = arith.constant 0 : i32
    return %2, %c0_i32_0 : i32, i32
  }
  func.func @transform_1(%arg0: i32, %arg1: i32) -> (i32, i32) {
    %c1_i32 = arith.constant 1 : i32
    %0 = arith.muli %arg0, %c1_i32 : i32
    %1 = arith.addi %0, %arg1 : i32
    %c0_i32 = arith.constant 0 : i32
    %2 = arith.minsi %1, %c0_i32 : i32
    %c0_i32_0 = arith.constant 0 : i32
    %c0_i32_1 = arith.constant 0 : i32
    return %2, %c0_i32_0 : i32, i32
  }
  func.func @transform_2(%arg0: i32, %arg1: i32) -> (i32, i32) {
    %c1_i32 = arith.constant 1 : i32
    %0 = arith.muli %arg0, %c1_i32 : i32
    %1 = arith.addi %0, %arg1 : i32
    %c0_i32 = arith.constant 0 : i32
    %2 = arith.minsi %1, %c0_i32 : i32
    %c0_i32_0 = arith.constant 0 : i32
    %c0_i32_1 = arith.constant 0 : i32
    return %2, %c0_i32_0 : i32, i32
  }
  func.func @transform_3(%arg0: i32, %arg1: i32) -> (i32, i32) {
    %c1_i32 = arith.constant 1 : i32
    %0 = arith.muli %arg0, %c1_i32 : i32
    %1 = arith.addi %0, %arg1 : i32
    %c0_i32 = arith.constant 0 : i32
    %2 = arith.minsi %1, %c0_i32 : i32
    %c0_i32_0 = arith.constant 0 : i32
    %c0_i32_1 = arith.constant 0 : i32
    return %2, %c0_i32_0 : i32, i32
  }
  func.func @transform_4(%arg0: i32, %arg1: i32) -> (i32, i32, i32, i32) {
    %c0_i32 = arith.constant 0 : i32
    %c0_i32_0 = arith.constant 0 : i32
    %c0_i32_1 = arith.constant 0 : i32
    %c0_i32_2 = arith.constant 0 : i32
    return %arg0, %c0_i32, %c0_i32_0, %c0_i32_1 : i32, i32, i32, i32
  }
}

</mosaic_0001>

<llo_original>
// kernel: cl_dice_loss.1
$region0: #{cl_dice_loss.1}
  #allocation0 [shape = 'u32[]', space=smem, size = 0x4, offset = 0x4, fixed_abs, tag = 'smem constant byte address 0x4 - core index']
  #allocation1 [shape = 'u32[144,128]{1,0:T(1,128)}', space=vmem, size = 0x12000, scoped, tag = 'internal scratch']
  %s0 = inlined_call_operand.vmem [shape: f32[32,128], index: 0, kind: input, shape index: {}]
  %s1 = inlined_call_operand.vmem [shape: f32[32,128], index: 1, kind: input, shape index: {}]
  %s2 = inlined_call_operand.vmem [shape: f32[32,128], index: 2, kind: input, shape index: {}]
  %s3 = inlined_call_operand.vmem [shape: f32[32,128], index: 3, kind: input, shape index: {}]
  %s4 = inlined_call_operand.vmem [shape: f32[1,4,8,128], index: 4, kind: output, shape index: {}]
  %s5 = sld [smem:[#allocation0]]
  $region30: #{cl_dice_loss.1} parent=0
    _
  %s7 = ssub.s32 1, %s5
  %s8 = scalar_select 0, %s7, %s5
  // Predicated region
  $region2: #{cl_dice_loss.1} parent=0 // pred_check
    _
  $region3: #{cl_dice_loss.1} parent=0 // pred_check_branch
    %10 = sbr.rel (0) target = $region5
  $region4: #{cl_dice_loss.1} parent=0 // pred_region
    %s11 = sadd.s32 0, 0
    %p12 = scmp.lt.s32.totalorder %s11, 0
    %s13 = scalar_select %p12, %s11, 0
    %s14 = smul.u32 4, %s13
    %p15 = scmp.lt.s32.totalorder %s14, 3
    %s16 = scalar_select %p15, %s14, 3
    %s17 = smul.addr %s16, 8
    %s18 = scalar_lea.vmem %s0, %s17
    %s19 = sadd.s32 0, 0
    %p20 = scmp.lt.s32.totalorder %s19, 0
    %s21 = scalar_select %p20, %s19, 0
    %s22 = smul.u32 4, %s21
  $region5: #{cl_dice_loss.1} parent=0 // pred_fallthru
    _
  // Predicated region
  $region6: #{cl_dice_loss.1} parent=0 // pred_check
    _
  $region7: #{cl_dice_loss.1} parent=0 // pred_check_branch
    %24 = sbr.rel (0) target = $region9
  $region8: #{cl_dice_loss.1} parent=0 // pred_region
    %s25 = sadd.s32 0, 0
    %p26 = scmp.lt.s32.totalorder %s25, 0
    %s27 = scalar_select %p26, %s25, 0
    %s28 = smul.u32 4, %s27
    %p29 = scmp.lt.s32.totalorder %s28, 3
    %s30 = scalar_select %p29, %s28, 3
    %s31 = smul.addr %s30, 8
    %s32 = scalar_lea.vmem %s1, %s31
    %s33 = sadd.s32 0, 0
    %p34 = scmp.lt.s32.totalorder %s33, 0
    %s35 = scalar_select %p34, %s33, 0
    %s36 = smul.u32 4, %s35
  $region9: #{cl_dice_loss.1} parent=0 // pred_fallthru
    _
  // Predicated region
  $region10: #{cl_dice_loss.1} parent=0 // pred_check
    _
  $region11: #{cl_dice_loss.1} parent=0 // pred_check_branch
    %38 = sbr.rel (0) target = $region13
  $region12: #{cl_dice_loss.1} parent=0 // pred_region
    %s39 = sadd.s32 0, 0
    %p40 = scmp.lt.s32.totalorder %s39, 0
    %s41 = scalar_select %p40, %s39, 0
    %s42 = smul.u32 4, %s41
    %p43 = scmp.lt.s32.totalorder %s42, 3
    %s44 = scalar_select %p43, %s42, 3
    %s45 = smul.addr %s44, 8
    %s46 = scalar_lea.vmem %s2, %s45
    %s47 = sadd.s32 0, 0
    %p48 = scmp.lt.s32.totalorder %s47, 0
    %s49 = scalar_select %p48, %s47, 0
    %s50 = smul.u32 4, %s49
  $region13: #{cl_dice_loss.1} parent=0 // pred_fallthru
    _
  // Predicated region
  $region14: #{cl_dice_loss.1} parent=0 // pred_check
    _
  $region15: #{cl_dice_loss.1} parent=0 // pred_check_branch
    %52 = sbr.rel (0) target = $region17
  $region16: #{cl_dice_loss.1} parent=0 // pred_region
    %s53 = sadd.s32 0, 0
    %p54 = scmp.lt.s32.totalorder %s53, 0
    %s55 = scalar_select %p54, %s53, 0
    %s56 = smul.u32 4, %s55
    %p57 = scmp.lt.s32.totalorder %s56, 3
    %s58 = scalar_select %p57, %s56, 3
    %s59 = smul.addr %s58, 8
    %s60 = scalar_lea.vmem %s3, %s59
    %s61 = sadd.s32 0, 0
    %p62 = scmp.lt.s32.totalorder %s61, 0
    %s63 = scalar_select %p62, %s61, 0
    %s64 = smul.u32 4, %s63
  $region17: #{cl_dice_loss.1} parent=0 // pred_fallthru
    _
  %s65 = sadd.s32 0, 0
  %p66 = scmp.lt.s32.totalorder %s65, 0
  %s67 = scalar_select %p66, %s65, 0
  %s68 = smul.u32 4, %s67
  %p69 = scmp.lt.s32.totalorder %s68, 3
  %s70 = scalar_select %p69, %s68, 3
  %s71 = smul.addr %s70, 8
  %s72 = scalar_lea.vmem %s0, %s71
  %s73 = sadd.s32 0, 0
  %p74 = scmp.lt.s32.totalorder %s73, 0
  %s75 = scalar_select %p74, %s73, 0
  %s76 = smul.u32 4, %s75
  %p77 = scmp.lt.s32.totalorder %s76, 3
  %s78 = scalar_select %p77, %s76, 3
  %s79 = smul.addr %s78, 8
  %s80 = scalar_lea.vmem %s1, %s79
  %s81 = sadd.s32 0, 0
  %p82 = scmp.lt.s32.totalorder %s81, 0
  %s83 = scalar_select %p82, %s81, 0
  %s84 = smul.u32 4, %s83
  %p85 = scmp.lt.s32.totalorder %s84, 3
  %s86 = scalar_select %p85, %s84, 3
  %s87 = smul.addr %s86, 8
  %s88 = scalar_lea.vmem %s2, %s87
  %s89 = sadd.s32 0, 0
  %p90 = scmp.lt.s32.totalorder %s89, 0
  %s91 = scalar_select %p90, %s89, 0
  %s92 = smul.u32 4, %s91
  %p93 = scmp.lt.s32.totalorder %s92, 3
  %s94 = scalar_select %p93, %s92, 3
  %s95 = smul.addr %s94, 8
  %s96 = scalar_lea.vmem %s3, %s95
  %s97 = sadd.s32 0, 0
  %p98 = scmp.lt.s32.totalorder %s97, 0
  %s99 = scalar_select %p98, %s97, 0
  %s100 = smul.u32 4, %s99
  %p101 = scmp.lt.s32.totalorder %s100, 3
  %s102 = scalar_select %p101, %s100, 3
  %s103 = smul.addr %s102, 8
  %s104 = scalar_lea.vmem %s0, %s103
  %s105 = sadd.s32 0, 0
  %p106 = scmp.lt.s32.totalorder %s105, 0
  %s107 = scalar_select %p106, %s105, 0
  %s108 = smul.u32 4, %s107
  %s109 = sadd.s32 0, 0
  %p110 = scmp.lt.s32.totalorder %s109, 0
  %s111 = scalar_select %p110, %s109, 0
  %s112 = smul.u32 4, %s111
  %p113 = scmp.lt.s32.totalorder %s112, 3
  %s114 = scalar_select %p113, %s112, 3
  %s115 = smul.addr %s114, 8
  %s116 = scalar_lea.vmem %s1, %s115
  %s117 = sadd.s32 0, 0
  %p118 = scmp.lt.s32.totalorder %s117, 0
  %s119 = scalar_select %p118, %s117, 0
  %s120 = smul.u32 4, %s119
  %s121 = sadd.s32 0, 0
  %p122 = scmp.lt.s32.totalorder %s121, 0
  %s123 = scalar_select %p122, %s121, 0
  %s124 = smul.u32 4, %s123
  %p125 = scmp.lt.s32.totalorder %s124, 3
  %s126 = scalar_select %p125, %s124, 3
  %s127 = smul.addr %s126, 8
  %s128 = scalar_lea.vmem %s2, %s127
  %s129 = sadd.s32 0, 0
  %p130 = scmp.lt.s32.totalorder %s129, 0
  %s131 = scalar_select %p130, %s129, 0
  %s132 = smul.u32 4, %s131
  %s133 = sadd.s32 0, 0
  %p134 = scmp.lt.s32.totalorder %s133, 0
  %s135 = scalar_select %p134, %s133, 0
  %s136 = smul.u32 4, %s135
  %p137 = scmp.lt.s32.totalorder %s136, 3
  %s138 = scalar_select %p137, %s136, 3
  %s139 = smul.addr %s138, 8
  %s140 = scalar_lea.vmem %s3, %s139
  %s141 = sadd.s32 0, 0
  %p142 = scmp.lt.s32.totalorder %s141, 0
  %s143 = scalar_select %p142, %s141, 0
  %s144 = smul.u32 4, %s143
  %p145 = scmp.eq.s32.totalorder 0, 0
  // Predicated region
  $region18: #{cl_dice_loss.1} parent=0 // pred_check
    %p146 = pneg %p145
  $region19: #{cl_dice_loss.1} parent=0 // pred_check_branch
    %148 = sbr.rel (%p146) target = $region21
  $region20: #{cl_dice_loss.1} parent=0 // pred_region
    %149 = vst [vmem:[%s4] sm:$0xff] 0.0
    %150 = vst [vmem:[%s4 + $0x8] sm:$0xff] 0.0
    %151 = vst [vmem:[%s4 + $0x10] sm:$0xff] 0.0
    %152 = vst [vmem:[%s4 + $0x18] sm:$0xff] 0.0
  $region21: #{cl_dice_loss.1} parent=0 // pred_fallthru
    _
  %v153 = vld [vmem:[%s104] sm:$0xff]
  %v154 = vld [vmem:[%s104 + $0x8] sm:$0xff]
  %v155 = vld [vmem:[%s104 + $0x10] sm:$0xff]
  %v156 = vld [vmem:[%s104 + $0x18] sm:$0xff]
  %v157 = vld [vmem:[%s116] sm:$0xff]
  %v158 = vld [vmem:[%s116 + $0x8] sm:$0xff]
  %v159 = vld [vmem:[%s116 + $0x10] sm:$0xff]
  %v160 = vld [vmem:[%s116 + $0x18] sm:$0xff]
  %v161 = vld [vmem:[%s128] sm:$0xff]
  %v162 = vld [vmem:[%s128 + $0x8] sm:$0xff]
  %v163 = vld [vmem:[%s128 + $0x10] sm:$0xff]
  %v164 = vld [vmem:[%s128 + $0x18] sm:$0xff]
  %v165 = vld [vmem:[%s140] sm:$0xff]
  %v166 = vld [vmem:[%s140 + $0x8] sm:$0xff]
  %v167 = vld [vmem:[%s140 + $0x10] sm:$0xff]
  %v168 = vld [vmem:[%s140 + $0x18] sm:$0xff]
  %v169 = vmul.f32 %v165, %v153
  %v170 = vmul.f32 %v166, %v154
  %v171 = vmul.f32 %v167, %v155
  %v172 = vmul.f32 %v168, %v156
  %v173 = vmul.f32 %v161, %v157
  %v174 = vmul.f32 %v162, %v158
  %v175 = vmul.f32 %v163, %v159
  %v176 = vmul.f32 %v164, %v160
  %v177 = vld [vmem:[%s4] sm:$0xff]
  %v178 = vadd.f32 %v169, %v170
  %v179 = vadd.f32 %v178, %v171
  %v180 = vadd.f32 %v179, %v172
  %v181 = vadd.f32 %v177, %v180
  %182 = vst [vmem:[%s4] sm:$0xff] %v181
  %s183 = scalar_lea.vmem %s4, 8
  %v184 = vld [vmem:[%s183] sm:$0xff]
  %v185 = vadd.f32 %v165, %v166
  %v186 = vadd.f32 %v185, %v167
  %v187 = vadd.f32 %v186, %v168
  %v188 = vadd.f32 %v184, %v187
  %189 = vst [vmem:[%s183] sm:$0xff] %v188
  %s190 = scalar_lea.vmem %s4, 16
  %v191 = vld [vmem:[%s190] sm:$0xff]
  %v192 = vadd.f32 %v173, %v174
  %v193 = vadd.f32 %v192, %v175
  %v194 = vadd.f32 %v193, %v176
  %v195 = vadd.f32 %v191, %v194
  %196 = vst [vmem:[%s190] sm:$0xff] %v195
  %s197 = scalar_lea.vmem %s4, 24
  %v198 = vld [vmem:[%s197] sm:$0xff]
  %v199 = vadd.f32 %v161, %v162
  %v200 = vadd.f32 %v199, %v163
  %v201 = vadd.f32 %v200, %v164
  %v202 = vadd.f32 %v198, %v201
  %203 = vst [vmem:[%s197] sm:$0xff] %v202
  // Predicated region
  $region22: #{cl_dice_loss.1} parent=0 // pred_check
    _
  $region23: #{cl_dice_loss.1} parent=0 // pred_check_branch
    %205 = sbr.rel (0) target = $region25
  $region24: #{cl_dice_loss.1} parent=0 // pred_region
    _
  $region25: #{cl_dice_loss.1} parent=0 // pred_fallthru
    _
  // Predicated region
  $region26: #{cl_dice_loss.1} parent=0 // pred_check
    _
  $region27: #{cl_dice_loss.1} parent=0 // pred_check_branch
    %207 = sbr.rel (0) target = $region29
  $region28: #{cl_dice_loss.1} parent=0 // pred_region
    _
  $region29: #{cl_dice_loss.1} parent=0 // pred_fallthru
    _

</llo_original>
